<compile_context>
chip_gen: v7x
topology: tpu7x:2x2x1
jax: 0.10.0
libtpu: 0.0.40
codegen_flags: <defaults>
</compile_context>

<pallas_src>
import functools

import jax
import jax.numpy as jnp
from jax import lax
from jax.experimental import pallas as pl
from jax.experimental.pallas import tpu as pltpu


def _acc_lanes(x):
    """Sum over all leading axes, keeping the last (lane) axis -> (1, last).

    Leading (untiled) axes are unrolled into plain vreg adds; the final axis-0
    sum of the 2-D remainder is a single sublane reduce.  The cross-lane
    reduction is deliberately NOT done here (deferred to the epilogue).
    """
    while x.ndim > 2:
        x = sum(x[i] for i in range(x.shape[0]))
    return jnp.sum(x, axis=0, keepdims=True)


def _zero_dce_loss_kernel(
    enh_ref, orig_ref,                 # inputs  (Bp, 3, TH, W)
    sums_ref, color_ref,               # outputs (8, 128), (Bp, 128)
    recon_acc, expo_acc,               # scratch (1, W)
    illx_acc, spx_acc,                 # scratch (1, W-1)
    illy_acc, spy_acc,                 # scratch (1, W)
    csum_acc,                          # scratch (Bp, 3, W)
    ge_carry, dg_carry,                # scratch (Bp, W)
    *, total_h, ragged):
    Bp, C, TH, W = enh_ref.shape
    t = pl.program_id(1)               # H-tile index (reduction axis)
    n_t = pl.num_programs(1)

    # ---- init accumulators on the first H-tile of each batch split ----
    @pl.when(t == 0)
    def _init():
        recon_acc[...] = jnp.zeros_like(recon_acc)
        expo_acc[...] = jnp.zeros_like(expo_acc)
        illx_acc[...] = jnp.zeros_like(illx_acc)
        spx_acc[...] = jnp.zeros_like(spx_acc)
        illy_acc[...] = jnp.zeros_like(illy_acc)
        spy_acc[...] = jnp.zeros_like(spy_acc)
        csum_acc[...] = jnp.zeros_like(csum_acc)

    enh = enh_ref[...].astype(jnp.float32)    # native wire dtype -> f32 compute
    orig = orig_ref[...].astype(jnp.float32)

    # ---- masks for zero-padded rows (only generated when H % tile_h != 0) ----
    if ragged:
        n_valid = jnp.minimum(TH, total_h - t * TH)   # rows of this tile inside H
        rmask = lax.broadcasted_iota(jnp.int32, (TH, W), 0) < n_valid
        rmask_x = lax.broadcasted_iota(jnp.int32, (TH, W - 1), 0) < n_valid
        rmask_y = lax.broadcasted_iota(jnp.int32, (TH - 1, W), 0) < (n_valid - 1)
        mrow = lambda x: jnp.where(rmask[None], x, 0.0)          # (Bp, TH, W)
        mrow4 = lambda x: jnp.where(rmask[None, None], x, 0.0)   # (Bp, C, TH, W)
        mrow_x = lambda x: jnp.where(rmask_x[None], x, 0.0)      # (Bp, TH, W-1)
        mrow_y = lambda x: jnp.where(rmask_y[None], x, 0.0)      # (Bp, TH-1, W)
    else:
        mrow = mrow4 = mrow_x = mrow_y = (lambda x: x)

    # ---- reconstruction: sum (enhanced - original)^2 ----
    sq = (enh - orig) ** 2
    sq = sum(sq[:, c] for c in range(C))      # channel-sum first -> (Bp, TH, W)
    recon_acc[...] += _acc_lanes(mrow(sq))

    # ---- grayscale (ITU-R 601 weights) and shared gray difference ----
    ge = 0.299 * enh[:, 0] + 0.587 * enh[:, 1] + 0.114 * enh[:, 2]    # (Bp, TH, W)
    go = 0.299 * orig[:, 0] + 0.587 * orig[:, 1] + 0.114 * orig[:, 2]
    dg = ge - go          # spatial terms only ever need gradients of (ge - go)

    # ---- cross-tile H-gradient using the carried last row of the prev tile ----
    @pl.when(t > 0)
    def _boundary():
        de = ge_carry[...] - ge[:, 0, :]      # (Bp, W)
        dd = dg_carry[...] - dg[:, 0, :]
        illy_acc[...] += _acc_lanes(jnp.abs(de))
        spy_acc[...] += _acc_lanes(dd * dd)

    # ---- exposure: sum (gray - 0.6)^2 ----
    expo_acc[...] += _acc_lanes(mrow((ge - 0.6) ** 2))

    # ---- W-direction gradients (within rows; no tile-boundary issues) ----
    gex = ge[:, :, :-1] - ge[:, :, 1:]        # (Bp, TH, W-1)
    dgx = dg[:, :, :-1] - dg[:, :, 1:]        # == gex - gox
    illx_acc[...] += _acc_lanes(mrow_x(jnp.abs(gex)))
    spx_acc[...] += _acc_lanes(mrow_x(dgx * dgx))

    # ---- H-direction gradients within the tile ----
    gey = ge[:, :-1, :] - ge[:, 1:, :]        # (Bp, TH-1, W)
    dgy = dg[:, :-1, :] - dg[:, 1:, :]        # == gey - goy
    illy_acc[...] += _acc_lanes(mrow_y(jnp.abs(gey)))
    spy_acc[...] += _acc_lanes(mrow_y(dgy * dgy))

    # ---- per-(batch, channel) spatial sums for color constancy ----
    # Single fused sublane-reduce + full-width accumulate (no per-b/c loop).
    csum_acc[...] += jnp.sum(mrow4(enh), axis=2)        # (Bp, 3, W)

    # ---- carry the last gray / gray-diff rows for the next tile's boundary ----
    ge_carry[...] = ge[:, TH - 1, :]
    dg_carry[...] = dg[:, TH - 1, :]

    # ---- epilogue: one cross-lane reduction per term, write outputs ----
    @pl.when(t == n_t - 1)
    def _finalize():
        def row(v):
            return jnp.full((1, 128), v, dtype=jnp.float32)

        sums_ref[...] = jnp.concatenate(
            [row(jnp.sum(recon_acc[...])),
             row(jnp.sum(illx_acc[...])),
             row(jnp.sum(illy_acc[...])),
             row(jnp.sum(spx_acc[...])),
             row(jnp.sum(spy_acc[...])),
             row(jnp.sum(expo_acc[...])),
             row(0.0), row(0.0)],
            axis=0)

        inv_hw = 1.0 / float(total_h * W)
        csum = csum_acc[...]
        mr = jnp.sum(csum[:, 0, :], axis=-1, keepdims=True) * inv_hw    # (Bp, 1)
        mg = jnp.sum(csum[:, 1, :], axis=-1, keepdims=True) * inv_hw
        mb = jnp.sum(csum[:, 2, :], axis=-1, keepdims=True) * inv_hw
        d_rg = (mr - mg) ** 2
        d_rb = (mr - mb) ** 2
        d_gb = (mb - mg) ** 2
        color = jnp.sqrt(d_rg ** 2 + d_rb ** 2 + d_gb ** 2)             # (Bp, 1)
        color_ref[...] = jnp.broadcast_to(color, color_ref.shape)


def _vmem_budget():
    """Returns (vmem_limit_bytes, tile working-set budget) per TPU generation."""
    try:
        cap = int(pltpu.get_tpu_info().vmem_capacity_bytes)
    except Exception:
        cap = 64 * 1024 * 1024          # smallest current-gen per-core VMEM (v7x)
    # ~48 MiB scoped limit on v7x, ~96 MiB on v5e/v6e (128 MiB physical).
    vmem_limit = min((cap * 3) // 4, 96 * 1024 * 1024)
    tile_budget = (vmem_limit * 3) // 5
    return vmem_limit, tile_budget


def _pick_tile_h(Bp, C, H, W, itemsize, budget_bytes):
    """Largest 8-aligned TH whose working set fits `budget_bytes`.

    Per H-row cost counts the 2 inputs x 2 pipeline buffers in the wire dtype
    PLUS ~4 tile-sized f32 in-kernel intermediates (casts, gray/diff images,
    gradients) — the previous sizing ignored the intermediates.
    """
    bytes_per_row = Bp * C * W * (2 * 2 * itemsize + 4 * 4)
    max_th = int(budget_bytes // bytes_per_row)
    if max_th >= H:
        return H                        # whole image fits: single grid step
    th_cap = max(8, (max_th // 8) * 8)
    # Balance the tiles so the ragged/padded tail is as small as possible.
    n = (H + th_cap - 1) // th_cap
    rows = (H + n - 1) // n
    th = ((rows + 7) // 8) * 8
    return min(th, th_cap)


def zero_dce_loss(enhanced, curves, original, *, tile_h=None, core_split=None):
    """Matches ZeroDCELoss.forward. `curves` is unused (as in the torch code)."""
    del curves
    B, C, H, W = enhanced.shape
    assert C == 3, "ZeroDCELoss expects 3-channel (RGB) inputs"
    assert original.shape == (B, C, H, W)
    assert H >= 2 and W >= 2

    # Batch split across TensorCores (2x on v7x megacore; harmless on 1-TC
    # v5e/v6e where the parallel axis just becomes a short sequential loop).
    if core_split is None:
        core_split = 2 if (B % 2 == 0 and B >= 2) else 1
    if B % core_split != 0:
        raise ValueError(f"core_split={core_split} must divide batch {B}")
    Bp = B // core_split

    itemsize = max(enhanced.dtype.itemsize, original.dtype.itemsize)
    vmem_limit, tile_budget = _vmem_budget()
    if tile_h is None:
        tile_h = _pick_tile_h(Bp, C, H, W, itemsize, tile_budget)
    if tile_h != H and tile_h % 8 != 0:
        raise ValueError(f"tile_h={tile_h} must be a multiple of 8 (or equal H)")

    num_tiles = (H + tile_h - 1) // tile_h
    h_pad = num_tiles * tile_h
    ragged = h_pad != H
    if ragged:
        # Zero-pad H to a tile multiple; padded rows are masked out in-kernel.
        pad = ((0, 0), (0, 0), (0, h_pad - H), (0, 0))
        enhanced = jnp.pad(enhanced, pad)
        original = jnp.pad(original, pad)

    kernel = functools.partial(_zero_dce_loss_kernel, total_h=H, ragged=ragged)

    grid_spec = pltpu.PrefetchScalarGridSpec(
        num_scalar_prefetch=0,
        grid=(core_split, num_tiles),
        in_specs=[
            pl.BlockSpec((Bp, C, tile_h, W), lambda p, t: (p, 0, t, 0)),
            pl.BlockSpec((Bp, C, tile_h, W), lambda p, t: (p, 0, t, 0)),
        ],
        out_specs=(
            pl.BlockSpec((None, 8, 128), lambda p, t: (p, 0, 0)),
            pl.BlockSpec((None, Bp, 128), lambda p, t: (p, 0, 0)),
        ),
        scratch_shapes=[
            pltpu.VMEM((1, W), jnp.float32),       # reconstruction
            pltpu.VMEM((1, W), jnp.float32),       # exposure
            pltpu.VMEM((1, W - 1), jnp.float32),   # illumination grad-x
            pltpu.VMEM((1, W - 1), jnp.float32),   # spatial grad-x
            pltpu.VMEM((1, W), jnp.float32),       # illumination grad-y
            pltpu.VMEM((1, W), jnp.float32),       # spatial grad-y
            pltpu.VMEM((Bp, 3, W), jnp.float32),   # per-(batch,channel) sums
            pltpu.VMEM((Bp, W), jnp.float32),      # gray(enhanced) carry row
            pltpu.VMEM((Bp, W), jnp.float32),      # gray-difference carry row
        ],
    )

    bytes_accessed = B * C * H * W * (enhanced.dtype.itemsize
                                      + original.dtype.itemsize)
    cost = pl.CostEstimate(flops=int(20 * B * C * H * W), transcendentals=B,
                           bytes_accessed=int(bytes_accessed))

    sums, color = pl.pallas_call(
        kernel,
        grid_spec=grid_spec,
        out_shape=(
            jax.ShapeDtypeStruct((core_split, 8, 128), jnp.float32),
            jax.ShapeDtypeStruct((core_split, Bp, 128), jnp.float32),
        ),
        compiler_params=pltpu.CompilerParams(
            dimension_semantics=("parallel", "arbitrary"),
            vmem_limit_bytes=int(vmem_limit),
        ),
        cost_estimate=cost,
    )(enhanced, original)

    # Scalar glue: per-split partial sums -> torch-style means / weighted total.
    s = jnp.sum(sums[:, :, 0], axis=0)                       # (8,)
    recon = s[0] / (B * C * H * W)
    illum = s[1] / (B * H * (W - 1)) + s[2] / (B * (H - 1) * W)
    spatial = s[3] / (B * H * (W - 1)) + s[4] / (B * (H - 1) * W)
    expo = s[5] / (B * H * W)
    color_loss = color.reshape(B, 128)[:, 0].reshape(B, 1, 1)   # same (B,1,1) as torch

    total = recon + 0.5 * illum + 0.1 * spatial + 0.5 * color_loss + 0.1 * expo

    metrics = {
        "reconstruction": recon,
        "illumination": illum,
        "spatial": spatial,
        "color": color_loss,
        "exposure": expo,
    }
    return total, metrics


def _reference_loss(enhanced, original):
    """Pure-JAX reference mirroring the PyTorch math, for validation."""
    recon = jnp.mean((enhanced - original) ** 2)

    def gray(x):
        return 0.299 * x[:, 0] + 0.587 * x[:, 1] + 0.114 * x[:, 2]

    ge, go = gray(enhanced), gray(original)
    gex = ge[:, :, :-1] - ge[:, :, 1:]
    gey = ge[:, :-1, :] - ge[:, 1:, :]
    gox = go[:, :, :-1] - go[:, :, 1:]
    goy = go[:, :-1, :] - go[:, 1:, :]
    illum = jnp.mean(jnp.abs(gex)) + jnp.mean(jnp.abs(gey))
    spatial = jnp.mean((gex - gox) ** 2) + jnp.mean((gey - goy) ** 2)

    mean_rgb = jnp.mean(enhanced, axis=(2, 3), keepdims=True)    # (B,3,1,1)
    mr, mg, mb = mean_rgb[:, 0], mean_rgb[:, 1], mean_rgb[:, 2]
    d_rg, d_rb, d_gb = (mr - mg) ** 2, (mr - mb) ** 2, (mb - mg) ** 2
    color = jnp.sqrt(d_rg ** 2 + d_rb ** 2 + d_gb ** 2)          # (B,1,1)

    expo = jnp.mean((ge - 0.6) ** 2)
    return recon + 0.5 * illum + 0.1 * spatial + 0.5 * color + 0.1 * expo


if __name__ == "__main__":
    key = jax.random.PRNGKey(0)
    k1, k2, k3 = jax.random.split(key, 3)

    # Config 1: multi-tile over H + even batch (2-way core-split grid axis).
    # Exercises the cross-tile gray-row carry and accumulate / finalize path.
    B, C, H, W = 2, 3, 32, 128
    enhanced = jax.random.uniform(k1, (B, C, H, W), dtype=jnp.float32)
    original = jax.random.uniform(k2, (B, C, H, W), dtype=jnp.float32)
    curves = jax.random.uniform(k3, (B, 24, H, W), dtype=jnp.float32)  # unused

    total, metrics = zero_dce_loss(enhanced, curves, original, tile_h=8)
    total = jax.block_until_ready(total)
    ref_total = _reference_loss(enhanced, original)
    assert total.shape == (B, 1, 1)
    assert jnp.allclose(total, ref_total, rtol=1e-4, atol=1e-6), (total, ref_total)

    # Config 2: odd batch (no core split), small image, auto-picked single tile.
    B2, H2, W2 = 1, 16, 16
    e2 = jax.random.uniform(k1, (B2, C, H2, W2), dtype=jnp.float32)
    o2 = jax.random.uniform(k2, (B2, C, H2, W2), dtype=jnp.float32)
    c2 = jnp.zeros((B2, 24, H2, W2), dtype=jnp.float32)
    t2, _ = zero_dce_loss(e2, c2, o2)
    t2 = jax.block_until_ready(t2)
    assert jnp.allclose(t2, _reference_loss(e2, o2), rtol=1e-4, atol=1e-6)

    # Config 3: ragged H (not a multiple of tile_h) -> zero-padded + masked tail.
    B3, H3, W3 = 2, 20, 128
    e3 = jax.random.uniform(k1, (B3, C, H3, W3), dtype=jnp.float32)
    o3 = jax.random.uniform(k2, (B3, C, H3, W3), dtype=jnp.float32)
    c3 = jnp.zeros((B3, 24, H3, W3), dtype=jnp.float32)
    t3, _ = zero_dce_loss(e3, c3, o3, tile_h=8)
    t3 = jax.block_until_ready(t3)
    assert jnp.allclose(t3, _reference_loss(e3, o3), rtol=1e-4, atol=1e-6)

    print("KERNEL_OK")
</pallas_src>

<mosaic_0001>
module attributes {stable_mosaic.version = 11 : i64} {
  func.func @_zero_dce_loss_kernel(%arg0: i32, %arg1: i32, %arg2: memref<1x3x8x128xf32, #tpu.memory_space<vmem>>, %arg3: memref<1x3x8x128xf32, #tpu.memory_space<vmem>>, %arg4: memref<1x8x128xf32, #tpu.memory_space<vmem>>, %arg5: memref<1x1x128xf32, #tpu.memory_space<vmem>>, %arg6: memref<1x128xf32, #tpu.memory_space<vmem>>, %arg7: memref<1x128xf32, #tpu.memory_space<vmem>>, %arg8: memref<1x127xf32, #tpu.memory_space<vmem>>, %arg9: memref<1x127xf32, #tpu.memory_space<vmem>>, %arg10: memref<1x128xf32, #tpu.memory_space<vmem>>, %arg11: memref<1x128xf32, #tpu.memory_space<vmem>>, %arg12: memref<1x3x128xf32, #tpu.memory_space<vmem>>, %arg13: memref<1x128xf32, #tpu.memory_space<vmem>>, %arg14: memref<1x128xf32, #tpu.memory_space<vmem>>) attributes {dimension_semantics = [#tpu.dimension_semantics<parallel>, #tpu.dimension_semantics<arbitrary>], iteration_bounds = array<i64: 2, 4>, scalar_prefetch = 0 : i64, scratch_operands = 9 : i64, tpu.core_type = #tpu.core_type<tc>, window_params = [{transform_indices = @transform_0, window_bounds = array<i64: 1, 3, 8, 128>}, {transform_indices = @transform_1, window_bounds = array<i64: 1, 3, 8, 128>}, {transform_indices = @transform_2, window_bounds = array<i64: 1, 8, 128>}, {transform_indices = @transform_3, window_bounds = array<i64: 1, 1, 128>}]} {
    %c0_i32 = arith.constant 0 : i32
    %0 = arith.cmpi eq, %arg1, %c0_i32 : i32
    %1 = arith.extui %0 : i1 to i32
    %c0_i32_0 = arith.constant 0 : i32
    %2 = arith.cmpi ne, %1, %c0_i32_0 : i32
    scf.if %2 {
      %cst_65 = arith.constant 0.000000e+00 : f32
      %129 = vector.broadcast %cst_65 : f32 to vector<1x128xf32>
      %c0_66 = arith.constant 0 : index
      %c0_67 = arith.constant 0 : index
      %130 = vector.load %arg6[%c0_66, %c0_67] : memref<1x128xf32, #tpu.memory_space<vmem>>, vector<1x128xf32>
      tpu.vector_store %arg6[%c0_66, %c0_67], %129 {strides = array<i32>} : memref<1x128xf32, #tpu.memory_space<vmem>>, vector<1x128xf32>,
      %cst_68 = arith.constant 0.000000e+00 : f32
      %131 = vector.broadcast %cst_68 : f32 to vector<1x128xf32>
      %c0_69 = arith.constant 0 : index
      %c0_70 = arith.constant 0 : index
      %132 = vector.load %arg7[%c0_69, %c0_70] : memref<1x128xf32, #tpu.memory_space<vmem>>, vector<1x128xf32>
      tpu.vector_store %arg7[%c0_69, %c0_70], %131 {strides = array<i32>} : memref<1x128xf32, #tpu.memory_space<vmem>>, vector<1x128xf32>,
      %cst_71 = arith.constant 0.000000e+00 : f32
      %133 = vector.broadcast %cst_71 : f32 to vector<1x127xf32>
      %c0_72 = arith.constant 0 : index
      %c0_73 = arith.constant 0 : index
      %134 = vector.load %arg8[%c0_72, %c0_73] : memref<1x127xf32, #tpu.memory_space<vmem>>, vector<1x127xf32>
      tpu.vector_store %arg8[%c0_72, %c0_73], %133 {strides = array<i32>} : memref<1x127xf32, #tpu.memory_space<vmem>>, vector<1x127xf32>,
      %cst_74 = arith.constant 0.000000e+00 : f32
      %135 = vector.broadcast %cst_74 : f32 to vector<1x127xf32>
      %c0_75 = arith.constant 0 : index
      %c0_76 = arith.constant 0 : index
      %136 = vector.load %arg9[%c0_75, %c0_76] : memref<1x127xf32, #tpu.memory_space<vmem>>, vector<1x127xf32>
      tpu.vector_store %arg9[%c0_75, %c0_76], %135 {strides = array<i32>} : memref<1x127xf32, #tpu.memory_space<vmem>>, vector<1x127xf32>,
      %cst_77 = arith.constant 0.000000e+00 : f32
      %137 = vector.broadcast %cst_77 : f32 to vector<1x128xf32>
      %c0_78 = arith.constant 0 : index
      %c0_79 = arith.constant 0 : index
      %138 = vector.load %arg10[%c0_78, %c0_79] : memref<1x128xf32, #tpu.memory_space<vmem>>, vector<1x128xf32>
      tpu.vector_store %arg10[%c0_78, %c0_79], %137 {strides = array<i32>} : memref<1x128xf32, #tpu.memory_space<vmem>>, vector<1x128xf32>,
      %cst_80 = arith.constant 0.000000e+00 : f32
      %139 = vector.broadcast %cst_80 : f32 to vector<1x128xf32>
      %c0_81 = arith.constant 0 : index
      %c0_82 = arith.constant 0 : index
      %140 = vector.load %arg11[%c0_81, %c0_82] : memref<1x128xf32, #tpu.memory_space<vmem>>, vector<1x128xf32>
      tpu.vector_store %arg11[%c0_81, %c0_82], %139 {strides = array<i32>} : memref<1x128xf32, #tpu.memory_space<vmem>>, vector<1x128xf32>,
      %cst_83 = arith.constant 0.000000e+00 : f32
      %141 = vector.broadcast %cst_83 : f32 to vector<1x3x128xf32>
      %c0_84 = arith.constant 0 : index
      %c0_85 = arith.constant 0 : index
      %c0_86 = arith.constant 0 : index
      %142 = vector.load %arg12[%c0_84, %c0_85, %c0_86] : memref<1x3x128xf32, #tpu.memory_space<vmem>>, vector<1x3x128xf32>
      tpu.vector_store %arg12[%c0_84, %c0_85, %c0_86], %141 {strides = array<i32>} : memref<1x3x128xf32, #tpu.memory_space<vmem>>, vector<1x3x128xf32>,
    } else {
    }
    %c0 = arith.constant 0 : index
    %c0_1 = arith.constant 0 : index
    %c0_2 = arith.constant 0 : index
    %c0_3 = arith.constant 0 : index
    %3 = vector.load %arg2[%c0, %c0_1, %c0_2, %c0_3] : memref<1x3x8x128xf32, #tpu.memory_space<vmem>>, vector<1x3x8x128xf32>
    %c0_4 = arith.constant 0 : index
    %c0_5 = arith.constant 0 : index
    %c0_6 = arith.constant 0 : index
    %c0_7 = arith.constant 0 : index
    %4 = vector.load %arg3[%c0_4, %c0_5, %c0_6, %c0_7] : memref<1x3x8x128xf32, #tpu.memory_space<vmem>>, vector<1x3x8x128xf32>
    %5 = arith.subf %3, %4 : vector<1x3x8x128xf32>
    %6 = arith.mulf %5, %5 : vector<1x3x8x128xf32>
    %7 = vector.extract_strided_slice %6 {offsets = [0, 0, 0, 0], sizes = [1, 1, 8, 128], strides = [1, 1, 1, 1]} : vector<1x3x8x128xf32> to vector<1x1x8x128xf32>
    %8 = vector.shape_cast %7 : vector<1x1x8x128xf32> to vector<1x8x128xf32>
    %cst = arith.constant 0.000000e+00 : f32
    %9 = vector.broadcast %cst : f32 to vector<1x8x128xf32>
    %10 = arith.addf %9, %8 : vector<1x8x128xf32>
    %11 = vector.extract_strided_slice %6 {offsets = [0, 1, 0, 0], sizes = [1, 1, 8, 128], strides = [1, 1, 1, 1]} : vector<1x3x8x128xf32> to vector<1x1x8x128xf32>
    %12 = vector.shape_cast %11 : vector<1x1x8x128xf32> to vector<1x8x128xf32>
    %13 = arith.addf %10, %12 : vector<1x8x128xf32>
    %14 = vector.extract_strided_slice %6 {offsets = [0, 2, 0, 0], sizes = [1, 1, 8, 128], strides = [1, 1, 1, 1]} : vector<1x3x8x128xf32> to vector<1x1x8x128xf32>
    %15 = vector.shape_cast %14 : vector<1x1x8x128xf32> to vector<1x8x128xf32>
    %16 = arith.addf %13, %15 : vector<1x8x128xf32>
    %c0_8 = arith.constant 0 : index
    %c0_9 = arith.constant 0 : index
    %17 = vector.load %arg6[%c0_8, %c0_9] : memref<1x128xf32, #tpu.memory_space<vmem>>, vector<1x128xf32>
    %18 = vector.shape_cast %16 : vector<1x8x128xf32> to vector<8x128xf32>
    %cst_10 = arith.constant 0.000000e+00 : f32
    %19 = vector.broadcast %cst_10 : f32 to vector<8x128xf32>
    %20 = arith.addf %19, %18 : vector<8x128xf32>
    %cst_11 = arith.constant dense<0.000000e+00> : vector<128xf32>
    %21 = vector.multi_reduction <add>, %20, %cst_11 [0] : vector<8x128xf32> to vector<128xf32>
    %22 = vector.shape_cast %21 : vector<128xf32> to vector<1x128xf32>
    %23 = arith.addf %17, %22 : vector<1x128xf32>
    %c0_12 = arith.constant 0 : index
    %c0_13 = arith.constant 0 : index
    %24 = vector.load %arg6[%c0_12, %c0_13] : memref<1x128xf32, #tpu.memory_space<vmem>>, vector<1x128xf32>
    tpu.vector_store %arg6[%c0_12, %c0_13], %23 {strides = array<i32>} : memref<1x128xf32, #tpu.memory_space<vmem>>, vector<1x128xf32>,
    %25 = vector.extract_strided_slice %3 {offsets = [0, 0, 0, 0], sizes = [1, 1, 8, 128], strides = [1, 1, 1, 1]} : vector<1x3x8x128xf32> to vector<1x1x8x128xf32>
    %26 = vector.shape_cast %25 : vector<1x1x8x128xf32> to vector<1x8x128xf32>
    %cst_14 = arith.constant 2.990000e-01 : f32
    %27 = vector.broadcast %cst_14 : f32 to vector<1x8x128xf32>
    %28 = arith.mulf %27, %26 : vector<1x8x128xf32>
    %29 = vector.extract_strided_slice %3 {offsets = [0, 1, 0, 0], sizes = [1, 1, 8, 128], strides = [1, 1, 1, 1]} : vector<1x3x8x128xf32> to vector<1x1x8x128xf32>
    %30 = vector.shape_cast %29 : vector<1x1x8x128xf32> to vector<1x8x128xf32>
    %cst_15 = arith.constant 5.870000e-01 : f32
    %31 = vector.broadcast %cst_15 : f32 to vector<1x8x128xf32>
    %32 = arith.mulf %31, %30 : vector<1x8x128xf32>
    %33 = arith.addf %28, %32 : vector<1x8x128xf32>
    %34 = vector.extract_strided_slice %3 {offsets = [0, 2, 0, 0], sizes = [1, 1, 8, 128], strides = [1, 1, 1, 1]} : vector<1x3x8x128xf32> to vector<1x1x8x128xf32>
    %35 = vector.shape_cast %34 : vector<1x1x8x128xf32> to vector<1x8x128xf32>
    %cst_16 = arith.constant 1.140000e-01 : f32
    %36 = vector.broadcast %cst_16 : f32 to vector<1x8x128xf32>
    %37 = arith.mulf %36, %35 : vector<1x8x128xf32>
    %38 = arith.addf %33, %37 : vector<1x8x128xf32>
    %39 = vector.extract_strided_slice %4 {offsets = [0, 0, 0, 0], sizes = [1, 1, 8, 128], strides = [1, 1, 1, 1]} : vector<1x3x8x128xf32> to vector<1x1x8x128xf32>
    %40 = vector.shape_cast %39 : vector<1x1x8x128xf32> to vector<1x8x128xf32>
    %cst_17 = arith.constant 2.990000e-01 : f32
    %41 = vector.broadcast %cst_17 : f32 to vector<1x8x128xf32>
    %42 = arith.mulf %41, %40 : vector<1x8x128xf32>
    %43 = vector.extract_strided_slice %4 {offsets = [0, 1, 0, 0], sizes = [1, 1, 8, 128], strides = [1, 1, 1, 1]} : vector<1x3x8x128xf32> to vector<1x1x8x128xf32>
    %44 = vector.shape_cast %43 : vector<1x1x8x128xf32> to vector<1x8x128xf32>
    %cst_18 = arith.constant 5.870000e-01 : f32
    %45 = vector.broadcast %cst_18 : f32 to vector<1x8x128xf32>
    %46 = arith.mulf %45, %44 : vector<1x8x128xf32>
    %47 = arith.addf %42, %46 : vector<1x8x128xf32>
    %48 = vector.extract_strided_slice %4 {offsets = [0, 2, 0, 0], sizes = [1, 1, 8, 128], strides = [1, 1, 1, 1]} : vector<1x3x8x128xf32> to vector<1x1x8x128xf32>
    %49 = vector.shape_cast %48 : vector<1x1x8x128xf32> to vector<1x8x128xf32>
    %cst_19 = arith.constant 1.140000e-01 : f32
    %50 = vector.broadcast %cst_19 : f32 to vector<1x8x128xf32>
    %51 = arith.mulf %50, %49 : vector<1x8x128xf32>
    %52 = arith.addf %47, %51 : vector<1x8x128xf32>
    %53 = arith.subf %38, %52 : vector<1x8x128xf32>
    %c0_i32_20 = arith.constant 0 : i32
    %54 = arith.cmpi sgt, %arg1, %c0_i32_20 : i32
    %55 = arith.extui %54 : i1 to i32
    %c0_i32_21 = arith.constant 0 : i32
    %56 = arith.cmpi ne, %55, %c0_i32_21 : i32
    scf.if %56 {
      %c0_65 = arith.constant 0 : index
      %c0_66 = arith.constant 0 : index
      %129 = vector.load %arg13[%c0_65, %c0_66] : memref<1x128xf32, #tpu.memory_space<vmem>>, vector<1x128xf32>
      %130 = vector.extract_strided_slice %38 {offsets = [0, 0, 0], sizes = [1, 1, 128], strides = [1, 1, 1]} : vector<1x8x128xf32> to vector<1x1x128xf32>
      %131 = vector.shape_cast %130 : vector<1x1x128xf32> to vector<1x128xf32>
      %132 = arith.subf %129, %131 : vector<1x128xf32>
      %c0_67 = arith.constant 0 : index
      %c0_68 = arith.constant 0 : index
      %133 = vector.load %arg14[%c0_67, %c0_68] : memref<1x128xf32, #tpu.memory_space<vmem>>, vector<1x128xf32>
      %134 = vector.extract_strided_slice %53 {offsets = [0, 0, 0], sizes = [1, 1, 128], strides = [1, 1, 1]} : vector<1x8x128xf32> to vector<1x1x128xf32>
      %135 = vector.shape_cast %134 : vector<1x1x128xf32> to vector<1x128xf32>
      %136 = arith.subf %133, %135 : vector<1x128xf32>
      %c0_69 = arith.constant 0 : index
      %c0_70 = arith.constant 0 : index
      %137 = vector.load %arg10[%c0_69, %c0_70] : memref<1x128xf32, #tpu.memory_space<vmem>>, vector<1x128xf32>
      %138 = math.absf %132 : vector<1x128xf32>
      %cst_71 = arith.constant dense<0.000000e+00> : vector<128xf32>
      %139 = vector.multi_reduction <add>, %138, %cst_71 [0] : vector<1x128xf32> to vector<128xf32>
      %140 = vector.shape_cast %139 : vector<128xf32> to vector<1x128xf32>
      %141 = arith.addf %137, %140 : vector<1x128xf32>
      %c0_72 = arith.constant 0 : index
      %c0_73 = arith.constant 0 : index
      %142 = vector.load %arg10[%c0_72, %c0_73] : memref<1x128xf32, #tpu.memory_space<vmem>>, vector<1x128xf32>
      tpu.vector_store %arg10[%c0_72, %c0_73], %141 {strides = array<i32>} : memref<1x128xf32, #tpu.memory_space<vmem>>, vector<1x128xf32>,
      %c0_74 = arith.constant 0 : index
      %c0_75 = arith.constant 0 : index
      %143 = vector.load %arg11[%c0_74, %c0_75] : memref<1x128xf32, #tpu.memory_space<vmem>>, vector<1x128xf32>
      %144 = arith.mulf %136, %136 : vector<1x128xf32>
      %cst_76 = arith.constant dense<0.000000e+00> : vector<128xf32>
      %145 = vector.multi_reduction <add>, %144, %cst_76 [0] : vector<1x128xf32> to vector<128xf32>
      %146 = vector.shape_cast %145 : vector<128xf32> to vector<1x128xf32>
      %147 = arith.addf %143, %146 : vector<1x128xf32>
      %c0_77 = arith.constant 0 : index
      %c0_78 = arith.constant 0 : index
      %148 = vector.load %arg11[%c0_77, %c0_78] : memref<1x128xf32, #tpu.memory_space<vmem>>, vector<1x128xf32>
      tpu.vector_store %arg11[%c0_77, %c0_78], %147 {strides = array<i32>} : memref<1x128xf32, #tpu.memory_space<vmem>>, vector<1x128xf32>,
    } else {
    }
    %c0_22 = arith.constant 0 : index
    %c0_23 = arith.constant 0 : index
    %57 = vector.load %arg7[%c0_22, %c0_23] : memref<1x128xf32, #tpu.memory_space<vmem>>, vector<1x128xf32>
    %cst_24 = arith.constant 6.000000e-01 : f32
    %58 = vector.broadcast %cst_24 : f32 to vector<1x8x128xf32>
    %59 = arith.subf %38, %58 : vector<1x8x128xf32>
    %60 = arith.mulf %59, %59 : vector<1x8x128xf32>
    %61 = vector.shape_cast %60 : vector<1x8x128xf32> to vector<8x128xf32>
    %cst_25 = arith.constant 0.000000e+00 : f32
    %62 = vector.broadcast %cst_25 : f32 to vector<8x128xf32>
    %63 = arith.addf %62, %61 : vector<8x128xf32>
    %cst_26 = arith.constant dense<0.000000e+00> : vector<128xf32>
    %64 = vector.multi_reduction <add>, %63, %cst_26 [0] : vector<8x128xf32> to vector<128xf32>
    %65 = vector.shape_cast %64 : vector<128xf32> to vector<1x128xf32>
    %66 = arith.addf %57, %65 : vector<1x128xf32>
    %c0_27 = arith.constant 0 : index
    %c0_28 = arith.constant 0 : index
    %67 = vector.load %arg7[%c0_27, %c0_28] : memref<1x128xf32, #tpu.memory_space<vmem>>, vector<1x128xf32>
    tpu.vector_store %arg7[%c0_27, %c0_28], %66 {strides = array<i32>} : memref<1x128xf32, #tpu.memory_space<vmem>>, vector<1x128xf32>,
    %68 = vector.extract_strided_slice %38 {offsets = [0, 0, 0], sizes = [1, 8, 127], strides = [1, 1, 1]} : vector<1x8x128xf32> to vector<1x8x127xf32>
    %69 = vector.extract_strided_slice %38 {offsets = [0, 0, 1], sizes = [1, 8, 127], strides = [1, 1, 1]} : vector<1x8x128xf32> to vector<1x8x127xf32>
    %70 = arith.subf %68, %69 : vector<1x8x127xf32>
    %71 = vector.extract_strided_slice %53 {offsets = [0, 0, 0], sizes = [1, 8, 127], strides = [1, 1, 1]} : vector<1x8x128xf32> to vector<1x8x127xf32>
    %72 = vector.extract_strided_slice %53 {offsets = [0, 0, 1], sizes = [1, 8, 127], strides = [1, 1, 1]} : vector<1x8x128xf32> to vector<1x8x127xf32>
    %73 = arith.subf %71, %72 : vector<1x8x127xf32>
    %c0_29 = arith.constant 0 : index
    %c0_30 = arith.constant 0 : index
    %74 = vector.load %arg8[%c0_29, %c0_30] : memref<1x127xf32, #tpu.memory_space<vmem>>, vector<1x127xf32>
    %75 = math.absf %70 : vector<1x8x127xf32>
    %76 = vector.shape_cast %75 : vector<1x8x127xf32> to vector<8x127xf32>
    %cst_31 = arith.constant 0.000000e+00 : f32
    %77 = vector.broadcast %cst_31 : f32 to vector<8x127xf32>
    %78 = arith.addf %77, %76 : vector<8x127xf32>
    %cst_32 = arith.constant dense<0.000000e+00> : vector<127xf32>
    %79 = vector.multi_reduction <add>, %78, %cst_32 [0] : vector<8x127xf32> to vector<127xf32>
    %80 = vector.shape_cast %79 : vector<127xf32> to vector<1x127xf32>
    %81 = arith.addf %74, %80 : vector<1x127xf32>
    %c0_33 = arith.constant 0 : index
    %c0_34 = arith.constant 0 : index
    %82 = vector.load %arg8[%c0_33, %c0_34] : memref<1x127xf32, #tpu.memory_space<vmem>>, vector<1x127xf32>
    tpu.vector_store %arg8[%c0_33, %c0_34], %81 {strides = array<i32>} : memref<1x127xf32, #tpu.memory_space<vmem>>, vector<1x127xf32>,
    %c0_35 = arith.constant 0 : index
    %c0_36 = arith.constant 0 : index
    %83 = vector.load %arg9[%c0_35, %c0_36] : memref<1x127xf32, #tpu.memory_space<vmem>>, vector<1x127xf32>
    %84 = arith.mulf %73, %73 : vector<1x8x127xf32>
    %85 = vector.shape_cast %84 : vector<1x8x127xf32> to vector<8x127xf32>
    %cst_37 = arith.constant 0.000000e+00 : f32
    %86 = vector.broadcast %cst_37 : f32 to vector<8x127xf32>
    %87 = arith.addf %86, %85 : vector<8x127xf32>
    %cst_38 = arith.constant dense<0.000000e+00> : vector<127xf32>
    %88 = vector.multi_reduction <add>, %87, %cst_38 [0] : vector<8x127xf32> to vector<127xf32>
    %89 = vector.shape_cast %88 : vector<127xf32> to vector<1x127xf32>
    %90 = arith.addf %83, %89 : vector<1x127xf32>
    %c0_39 = arith.constant 0 : index
    %c0_40 = arith.constant 0 : index
    %91 = vector.load %arg9[%c0_39, %c0_40] : memref<1x127xf32, #tpu.memory_space<vmem>>, vector<1x127xf32>
    tpu.vector_store %arg9[%c0_39, %c0_40], %90 {strides = array<i32>} : memref<1x127xf32, #tpu.memory_space<vmem>>, vector<1x127xf32>,
    %92 = vector.extract_strided_slice %38 {offsets = [0, 0, 0], sizes = [1, 7, 128], strides = [1, 1, 1]} : vector<1x8x128xf32> to vector<1x7x128xf32>
    %93 = vector.extract_strided_slice %38 {offsets = [0, 1, 0], sizes = [1, 7, 128], strides = [1, 1, 1]} : vector<1x8x128xf32> to vector<1x7x128xf32>
    %94 = arith.subf %92, %93 : vector<1x7x128xf32>
    %95 = vector.extract_strided_slice %53 {offsets = [0, 0, 0], sizes = [1, 7, 128], strides = [1, 1, 1]} : vector<1x8x128xf32> to vector<1x7x128xf32>
    %96 = vector.extract_strided_slice %53 {offsets = [0, 1, 0], sizes = [1, 7, 128], strides = [1, 1, 1]} : vector<1x8x128xf32> to vector<1x7x128xf32>
    %97 = arith.subf %95, %96 : vector<1x7x128xf32>
    %c0_41 = arith.constant 0 : index
    %c0_42 = arith.constant 0 : index
    %98 = vector.load %arg10[%c0_41, %c0_42] : memref<1x128xf32, #tpu.memory_space<vmem>>, vector<1x128xf32>
    %99 = math.absf %94 : vector<1x7x128xf32>
    %100 = vector.shape_cast %99 : vector<1x7x128xf32> to vector<7x128xf32>
    %cst_43 = arith.constant 0.000000e+00 : f32
    %101 = vector.broadcast %cst_43 : f32 to vector<7x128xf32>
    %102 = arith.addf %101, %100 : vector<7x128xf32>
    %cst_44 = arith.constant dense<0.000000e+00> : vector<128xf32>
    %103 = vector.multi_reduction <add>, %102, %cst_44 [0] : vector<7x128xf32> to vector<128xf32>
    %104 = vector.shape_cast %103 : vector<128xf32> to vector<1x128xf32>
    %105 = arith.addf %98, %104 : vector<1x128xf32>
    %c0_45 = arith.constant 0 : index
    %c0_46 = arith.constant 0 : index
    %106 = vector.load %arg10[%c0_45, %c0_46] : memref<1x128xf32, #tpu.memory_space<vmem>>, vector<1x128xf32>
    tpu.vector_store %arg10[%c0_45, %c0_46], %105 {strides = array<i32>} : memref<1x128xf32, #tpu.memory_space<vmem>>, vector<1x128xf32>,
    %c0_47 = arith.constant 0 : index
    %c0_48 = arith.constant 0 : index
    %107 = vector.load %arg11[%c0_47, %c0_48] : memref<1x128xf32, #tpu.memory_space<vmem>>, vector<1x128xf32>
    %108 = arith.mulf %97, %97 : vector<1x7x128xf32>
    %109 = vector.shape_cast %108 : vector<1x7x128xf32> to vector<7x128xf32>
    %cst_49 = arith.constant 0.000000e+00 : f32
    %110 = vector.broadcast %cst_49 : f32 to vector<7x128xf32>
    %111 = arith.addf %110, %109 : vector<7x128xf32>
    %cst_50 = arith.constant dense<0.000000e+00> : vector<128xf32>
    %112 = vector.multi_reduction <add>, %111, %cst_50 [0] : vector<7x128xf32> to vector<128xf32>
    %113 = vector.shape_cast %112 : vector<128xf32> to vector<1x128xf32>
    %114 = arith.addf %107, %113 : vector<1x128xf32>
    %c0_51 = arith.constant 0 : index
    %c0_52 = arith.constant 0 : index
    %115 = vector.load %arg11[%c0_51, %c0_52] : memref<1x128xf32, #tpu.memory_space<vmem>>, vector<1x128xf32>
    tpu.vector_store %arg11[%c0_51, %c0_52], %114 {strides = array<i32>} : memref<1x128xf32, #tpu.memory_space<vmem>>, vector<1x128xf32>,
    %c0_53 = arith.constant 0 : index
    %c0_54 = arith.constant 0 : index
    %c0_55 = arith.constant 0 : index
    %116 = vector.load %arg12[%c0_53, %c0_54, %c0_55] : memref<1x3x128xf32, #tpu.memory_space<vmem>>, vector<1x3x128xf32>
    %cst_56 = arith.constant dense<0.000000e+00> : vector<1x3x128xf32>
    %117 = vector.multi_reduction <add>, %3, %cst_56 [2] : vector<1x3x8x128xf32> to vector<1x3x128xf32>
    %118 = arith.addf %116, %117 : vector<1x3x128xf32>
    %c0_57 = arith.constant 0 : index
    %c0_58 = arith.constant 0 : index
    %c0_59 = arith.constant 0 : index
    %119 = vector.load %arg12[%c0_57, %c0_58, %c0_59] : memref<1x3x128xf32, #tpu.memory_space<vmem>>, vector<1x3x128xf32>
    tpu.vector_store %arg12[%c0_57, %c0_58, %c0_59], %118 {strides = array<i32>} : memref<1x3x128xf32, #tpu.memory_space<vmem>>, vector<1x3x128xf32>,
    %120 = vector.extract_strided_slice %38 {offsets = [0, 7, 0], sizes = [1, 1, 128], strides = [1, 1, 1]} : vector<1x8x128xf32> to vector<1x1x128xf32>
    %121 = vector.shape_cast %120 : vector<1x1x128xf32> to vector<1x128xf32>
    %c0_60 = arith.constant 0 : index
    %c0_61 = arith.constant 0 : index
    %122 = vector.load %arg13[%c0_60, %c0_61] : memref<1x128xf32, #tpu.memory_space<vmem>>, vector<1x128xf32>
    tpu.vector_store %arg13[%c0_60, %c0_61], %121 {strides = array<i32>} : memref<1x128xf32, #tpu.memory_space<vmem>>, vector<1x128xf32>,
    %123 = vector.extract_strided_slice %53 {offsets = [0, 7, 0], sizes = [1, 1, 128], strides = [1, 1, 1]} : vector<1x8x128xf32> to vector<1x1x128xf32>
    %124 = vector.shape_cast %123 : vector<1x1x128xf32> to vector<1x128xf32>
    %c0_62 = arith.constant 0 : index
    %c0_63 = arith.constant 0 : index
    %125 = vector.load %arg14[%c0_62, %c0_63] : memref<1x128xf32, #tpu.memory_space<vmem>>, vector<1x128xf32>
    tpu.vector_store %arg14[%c0_62, %c0_63], %124 {strides = array<i32>} : memref<1x128xf32, #tpu.memory_space<vmem>>, vector<1x128xf32>,
    %c3_i32 = arith.constant 3 : i32
    %126 = arith.cmpi eq, %arg1, %c3_i32 : i32
    %127 = arith.extui %126 : i1 to i32
    %c0_i32_64 = arith.constant 0 : i32
    %128 = arith.cmpi ne, %127, %c0_i32_64 : i32
    scf.if %128 {
      %c0_65 = arith.constant 0 : index
      %c0_66 = arith.constant 0 : index
      %129 = vector.load %arg6[%c0_65, %c0_66] : memref<1x128xf32, #tpu.memory_space<vmem>>, vector<1x128xf32>
      %130 = vector.shape_cast %129 : vector<1x128xf32> to vector<1x1x128xf32>
      %cst_67 = arith.constant dense<0.000000e+00> : vector<1xf32>
      %131 = vector.multi_reduction <add>, %130, %cst_67 [1, 2] : vector<1x1x128xf32> to vector<1xf32>
      %132 = vector.shape_cast %131 : vector<1xf32> to vector<1x1x1xf32>
      %133 = vector.extract %132[0, 0, 0] : f32 from vector<1x1x1xf32>
      %134 = vector.broadcast %133 : f32 to vector<1x128xf32>
      %c0_68 = arith.constant 0 : index
      %c0_69 = arith.constant 0 : index
      %135 = vector.load %arg8[%c0_68, %c0_69] : memref<1x127xf32, #tpu.memory_space<vmem>>, vector<1x127xf32>
      %136 = vector.shape_cast %135 : vector<1x127xf32> to vector<1x1x127xf32>
      %cst_70 = arith.constant dense<0.000000e+00> : vector<1xf32>
      %137 = vector.multi_reduction <add>, %136, %cst_70 [1, 2] : vector<1x1x127xf32> to vector<1xf32>
      %138 = vector.shape_cast %137 : vector<1xf32> to vector<1x1x1xf32>
      %139 = vector.extract %138[0, 0, 0] : f32 from vector<1x1x1xf32>
      %140 = vector.broadcast %139 : f32 to vector<1x128xf32>
      %c0_71 = arith.constant 0 : index
      %c0_72 = arith.constant 0 : index
      %141 = vector.load %arg10[%c0_71, %c0_72] : memref<1x128xf32, #tpu.memory_space<vmem>>, vector<1x128xf32>
      %142 = vector.shape_cast %141 : vector<1x128xf32> to vector<1x1x128xf32>
      %cst_73 = arith.constant dense<0.000000e+00> : vector<1xf32>
      %143 = vector.multi_reduction <add>, %142, %cst_73 [1, 2] : vector<1x1x128xf32> to vector<1xf32>
      %144 = vector.shape_cast %143 : vector<1xf32> to vector<1x1x1xf32>
      %145 = vector.extract %144[0, 0, 0] : f32 from vector<1x1x1xf32>
      %146 = vector.broadcast %145 : f32 to vector<1x128xf32>
      %c0_74 = arith.constant 0 : index
      %c0_75 = arith.constant 0 : index
      %147 = vector.load %arg9[%c0_74, %c0_75] : memref<1x127xf32, #tpu.memory_space<vmem>>, vector<1x127xf32>
      %148 = vector.shape_cast %147 : vector<1x127xf32> to vector<1x1x127xf32>
      %cst_76 = arith.constant dense<0.000000e+00> : vector<1xf32>
      %149 = vector.multi_reduction <add>, %148, %cst_76 [1, 2] : vector<1x1x127xf32> to vector<1xf32>
      %150 = vector.shape_cast %149 : vector<1xf32> to vector<1x1x1xf32>
      %151 = vector.extract %150[0, 0, 0] : f32 from vector<1x1x1xf32>
      %152 = vector.broadcast %151 : f32 to vector<1x128xf32>
      %c0_77 = arith.constant 0 : index
      %c0_78 = arith.constant 0 : index
      %153 = vector.load %arg11[%c0_77, %c0_78] : memref<1x128xf32, #tpu.memory_space<vmem>>, vector<1x128xf32>
      %154 = vector.shape_cast %153 : vector<1x128xf32> to vector<1x1x128xf32>
      %cst_79 = arith.constant dense<0.000000e+00> : vector<1xf32>
      %155 = vector.multi_reduction <add>, %154, %cst_79 [1, 2] : vector<1x1x128xf32> to vector<1xf32>
      %156 = vector.shape_cast %155 : vector<1xf32> to vector<1x1x1xf32>
      %157 = vector.extract %156[0, 0, 0] : f32 from vector<1x1x1xf32>
      %158 = vector.broadcast %157 : f32 to vector<1x128xf32>
      %c0_80 = arith.constant 0 : index
      %c0_81 = arith.constant 0 : index
      %159 = vector.load %arg7[%c0_80, %c0_81] : memref<1x128xf32, #tpu.memory_space<vmem>>, vector<1x128xf32>
      %160 = vector.shape_cast %159 : vector<1x128xf32> to vector<1x1x128xf32>
      %cst_82 = arith.constant dense<0.000000e+00> : vector<1xf32>
      %161 = vector.multi_reduction <add>, %160, %cst_82 [1, 2] : vector<1x1x128xf32> to vector<1xf32>
      %162 = vector.shape_cast %161 : vector<1xf32> to vector<1x1x1xf32>
      %163 = vector.extract %162[0, 0, 0] : f32 from vector<1x1x1xf32>
      %164 = vector.broadcast %163 : f32 to vector<1x128xf32>
      %cst_83 = arith.constant 0.000000e+00 : f32
      %165 = vector.broadcast %cst_83 : f32 to vector<1x128xf32>
      %cst_84 = arith.constant 0.000000e+00 : f32
      %166 = vector.broadcast %cst_84 : f32 to vector<1x128xf32>
      %167 = tpu.concatenate %134, %140, %146, %152, %158, %164, %165, %166 in 0 : vector<1x128xf32>, vector<1x128xf32>, vector<1x128xf32>, vector<1x128xf32>, vector<1x128xf32>, vector<1x128xf32>, vector<1x128xf32>, vector<1x128xf32> -> vector<8x128xf32>
      %c0_85 = arith.constant 0 : index
      %c0_86 = arith.constant 0 : index
      %c0_87 = arith.constant 0 : index
      %168 = vector.load %arg4[%c0_85, %c0_86, %c0_87] : memref<1x8x128xf32, #tpu.memory_space<vmem>>, vector<1x8x128xf32>
      %169 = vector.shape_cast %168 : vector<1x8x128xf32> to vector<8x128xf32>
      %170 = vector.shape_cast %167 : vector<8x128xf32> to vector<1x8x128xf32>
      tpu.vector_store %arg4[%c0_85, %c0_86, %c0_87], %170 {strides = array<i32>} : memref<1x8x128xf32, #tpu.memory_space<vmem>>, vector<1x8x128xf32>,
      %c0_88 = arith.constant 0 : index
      %c0_89 = arith.constant 0 : index
      %c0_90 = arith.constant 0 : index
      %171 = vector.load %arg12[%c0_88, %c0_89, %c0_90] : memref<1x3x128xf32, #tpu.memory_space<vmem>>, vector<1x3x128xf32>
      %172 = vector.extract_strided_slice %171 {offsets = [0, 0, 0], sizes = [1, 1, 128], strides = [1, 1, 1]} : vector<1x3x128xf32> to vector<1x1x128xf32>
      %173 = vector.shape_cast %172 : vector<1x1x128xf32> to vector<1x128xf32>
      %cst_91 = arith.constant dense<0.000000e+00> : vector<1xf32>
      %174 = vector.multi_reduction <add>, %173, %cst_91 [1] : vector<1x128xf32> to vector<1xf32>
      %175 = vector.shape_cast %174 : vector<1xf32> to vector<1x1xf32>
      %cst_92 = arith.constant 2.44140625E-4 : f32
      %176 = vector.broadcast %cst_92 : f32 to vector<1x1xf32>
      %177 = arith.mulf %175, %176 : vector<1x1xf32>
      %178 = vector.extract_strided_slice %171 {offsets = [0, 1, 0], sizes = [1, 1, 128], strides = [1, 1, 1]} : vector<1x3x128xf32> to vector<1x1x128xf32>
      %179 = vector.shape_cast %178 : vector<1x1x128xf32> to vector<1x128xf32>
      %cst_93 = arith.constant dense<0.000000e+00> : vector<1xf32>
      %180 = vector.multi_reduction <add>, %179, %cst_93 [1] : vector<1x128xf32> to vector<1xf32>
      %181 = vector.shape_cast %180 : vector<1xf32> to vector<1x1xf32>
      %cst_94 = arith.constant 2.44140625E-4 : f32
      %182 = vector.broadcast %cst_94 : f32 to vector<1x1xf32>
      %183 = arith.mulf %181, %182 : vector<1x1xf32>
      %184 = vector.extract_strided_slice %171 {offsets = [0, 2, 0], sizes = [1, 1, 128], strides = [1, 1, 1]} : vector<1x3x128xf32> to vector<1x1x128xf32>
      %185 = vector.shape_cast %184 : vector<1x1x128xf32> to vector<1x128xf32>
      %cst_95 = arith.constant dense<0.000000e+00> : vector<1xf32>
      %186 = vector.multi_reduction <add>, %185, %cst_95 [1] : vector<1x128xf32> to vector<1xf32>
      %187 = vector.shape_cast %186 : vector<1xf32> to vector<1x1xf32>
      %cst_96 = arith.constant 2.44140625E-4 : f32
      %188 = vector.broadcast %cst_96 : f32 to vector<1x1xf32>
      %189 = arith.mulf %187, %188 : vector<1x1xf32>
      %190 = arith.subf %177, %183 : vector<1x1xf32>
      %191 = arith.mulf %190, %190 : vector<1x1xf32>
      %192 = arith.subf %177, %189 : vector<1x1xf32>
      %193 = arith.mulf %192, %192 : vector<1x1xf32>
      %194 = arith.subf %189, %183 : vector<1x1xf32>
      %195 = arith.mulf %194, %194 : vector<1x1xf32>
      %196 = arith.mulf %191, %191 : vector<1x1xf32>
      %197 = arith.mulf %193, %193 : vector<1x1xf32>
      %198 = arith.addf %196, %197 : vector<1x1xf32>
      %199 = arith.mulf %195, %195 : vector<1x1xf32>
      %200 = arith.addf %198, %199 : vector<1x1xf32>
      %201 = math.sqrt %200 : vector<1x1xf32>
      %202 = vector.shape_cast %201 : vector<1x1xf32> to vector<1x1xf32>
      %203 = vector.broadcast %202 : vector<1x1xf32> to vector<1x128xf32>
      %c0_97 = arith.constant 0 : index
      %c0_98 = arith.constant 0 : index
      %c0_99 = arith.constant 0 : index
      %204 = vector.load %arg5[%c0_97, %c0_98, %c0_99] : memref<1x1x128xf32, #tpu.memory_space<vmem>>, vector<1x1x128xf32>
      %205 = vector.shape_cast %204 : vector<1x1x128xf32> to vector<1x128xf32>
      %206 = vector.shape_cast %203 : vector<1x128xf32> to vector<1x1x128xf32>
      tpu.vector_store %arg5[%c0_97, %c0_98, %c0_99], %206 {strides = array<i32>} : memref<1x1x128xf32, #tpu.memory_space<vmem>>, vector<1x1x128xf32>,
    } else {
    }
    return
  }
  func.func @transform_0(%arg0: i32, %arg1: i32) -> (i32, i32, i32, i32) {
    %c0_i32 = arith.constant 0 : i32
    %c0_i32_0 = arith.constant 0 : i32
    %c0_i32_1 = arith.constant 0 : i32
    return %arg0, %c0_i32, %arg1, %c0_i32_0 : i32, i32, i32, i32
  }
  func.func @transform_1(%arg0: i32, %arg1: i32) -> (i32, i32, i32, i32) {
    %c0_i32 = arith.constant 0 : i32
    %c0_i32_0 = arith.constant 0 : i32
    %c0_i32_1 = arith.constant 0 : i32
    return %arg0, %c0_i32, %arg1, %c0_i32_0 : i32, i32, i32, i32
  }
  func.func @transform_2(%arg0: i32, %arg1: i32) -> (i32, i32, i32) {
    %c0_i32 = arith.constant 0 : i32
    %c0_i32_0 = arith.constant 0 : i32
    %c0_i32_1 = arith.constant 0 : i32
    return %arg0, %c0_i32, %c0_i32_0 : i32, i32, i32
  }
  func.func @transform_3(%arg0: i32, %arg1: i32) -> (i32, i32, i32) {
    %c0_i32 = arith.constant 0 : i32
    %c0_i32_0 = arith.constant 0 : i32
    %c0_i32_1 = arith.constant 0 : i32
    return %arg0, %c0_i32, %c0_i32_0 : i32, i32, i32
  }
}

</mosaic_0001>

<llo_original>
// kernel: tpu_custom_call.1
$region0: #{tpu_custom_call.1}
  #allocation0 [shape = 'u32[]', space=smem, size = 0x4, offset = 0x4, fixed_abs, tag = 'smem constant byte address 0x4 - core index']
  #allocation1 [shape = 'u32[144,128]{1,0:T(1,128)}', space=vmem, size = 0x12000, scoped, tag = 'internal scratch']
  #allocation2 [shape = 'f32[1,128]{1,0:T(1,128)}', space=vmem, size = 0x200, scoped, tag = 'scratch operand']
  #allocation3 [shape = 'f32[1,128]{1,0:T(1,128)}', space=vmem, size = 0x200, scoped, tag = 'scratch operand']
  #allocation4 [shape = 'f32[1,127]{1,0:T(1,128)}', space=vmem, size = 0x200, scoped, tag = 'scratch operand']
  #allocation5 [shape = 'f32[1,127]{1,0:T(1,128)}', space=vmem, size = 0x200, scoped, tag = 'scratch operand']
  #allocation6 [shape = 'f32[1,128]{1,0:T(1,128)}', space=vmem, size = 0x200, scoped, tag = 'scratch operand']
  #allocation7 [shape = 'f32[1,128]{1,0:T(1,128)}', space=vmem, size = 0x200, scoped, tag = 'scratch operand']
  #allocation8 [shape = 'f32[1,3,128]{2,1,0:T(4,128)}', space=vmem, size = 0x800, scoped, tag = 'scratch operand']
  #allocation9 [shape = 'f32[1,128]{1,0:T(1,128)}', space=vmem, size = 0x200, scoped, tag = 'scratch operand']
  #allocation10 [shape = 'f32[1,128]{1,0:T(1,128)}', space=vmem, size = 0x200, scoped, tag = 'scratch operand']
  %s0 = inlined_call_operand.hbm [shape: f32[2,3,32,128], index: 0, kind: input, shape index: {}]
  %s1 = inlined_call_operand.hbm [shape: f32[2,3,32,128], index: 1, kind: input, shape index: {}]
  %s2 = inlined_call_operand.hbm [shape: f32[2,8,128], index: 2, kind: output, shape index: {0}]
  %s3 = inlined_call_operand.hbm [shape: f32[2,1,128], index: 3, kind: output, shape index: {1}]
  %4 = xla_tuple %s2, %s3
  %s5 = sld [smem:[#allocation0]]
  $region69: #{tpu_custom_call.1} parent=0
    _
  %s7 = ssub.s32 1, %s5
  %s8 = scalar_select 0, %s7, %s5
  $region1: #{tpu_custom_call.1} parent=0
    #allocation11 [shape = 'u8[24576]{0}', space=vmem, size = 0x6000, scoped, tag = 'input window, operand 0']
    #allocation12 [shape = 's32[2]{0}', space=sflag, size = 0x8, scoped, tag = 'scoped memory for tpu_custom_call.1']
    #allocation13 [shape = 's32[2]{0}', space=sflag, size = 0x8, scoped, tag = 'scoped memory for tpu_custom_call.1']
    #allocation14 [shape = 'u8[24576]{0}', space=vmem, size = 0x6000, scoped, tag = 'input window, operand 1']
    #allocation15 [shape = 's32[2]{0}', space=sflag, size = 0x8, scoped, tag = 'scoped memory for tpu_custom_call.1']
    #allocation16 [shape = 'u8[8192]{0}', space=vmem, size = 0x2000, scoped, tag = 'output window, operand 0']
    #allocation17 [shape = 'u8[1024]{0}', space=vmem, size = 0x400, scoped, tag = 'output window, operand 1']
    #allocation18 [shape = 's32[2]{0}', space=sflag, size = 0x8, scoped, tag = 'scoped memory for tpu_custom_call.1']
    %9 = vsyncpa [#allocation12], 0
    %s10 = scalar_lea.sflag [#allocation12], 1
    %11 = vsyncpa %s10, 0
    %12 = vsyncpa [#allocation15], 0
    %s13 = scalar_lea.sflag [#allocation15], 1
    %14 = vsyncpa %s13, 0
    %15 = vsyncpa [#allocation13], 0
    %s16 = scalar_lea.sflag [#allocation13], 1
    %17 = vsyncpa %s16, 0
    %18 = vsyncpa [#allocation18], 0
    %s19 = scalar_lea.sflag [#allocation18], 1
    %20 = vsyncpa %s19, 0
    loop: start=0, step=1, limit=10
    $region2: #{tpu_custom_call.1} parent=1 // loop_pre_header
      _
    $region3: #{tpu_custom_call.1} parent=1 // loop_header
      %s22 = sphi 0, %s26
      %p23 = scmp.ge.s32.totalorder %s22, 10
      %s29 = sphi 0, %s41
      %s30 = sphi 0, %s37
      %s31 = sphi 0, %s29
      %s32 = sphi 0, %s30
      %s33 = sphi 0, %s31
      %s34 = sphi 0, %s32
      %s46 = sphi 0, %s48
      %s49 = sphi 0, %s46
      %s50 = sphi 0, %s49
      %s66 = sphi 0, %s50
      %s74 = sphi 0, %s76
      %s77 = sphi 0, %s74
      %s78 = sphi 0, %s77
      %s94 = sphi 0, %s78
      %s100 = sphi 0, %s102
      %s103 = sphi 0, %s100
      %s104 = sphi 0, %s103
      %s120 = sphi 0, %s104
      %s126 = sphi 0, %s128
      %s129 = sphi 0, %s126
      %s130 = sphi 0, %s129
      %s146 = sphi 0, %s130
    $region4: #{tpu_custom_call.1} parent=1 // loop_header_branch
      %25 = sbr.rel (%p23) target = $region8
    $region5: #{tpu_custom_call.1} parent=1 // loop_body
      %s27 = ssub.s32 %s22, 1
      %s28 = ssub.s32 %s22, 2
      %s35 = sadd.s32 1, %s30
      %p36 = scmp.ge.s32.totalorder %s35, 4
      %s37 = scalar_select %p36, 0, %s35
      %s38 = sadd.s32 1, %s29
      %s39 = scalar_select %p36, %s38, %s29
      %p40 = scmp.ge.s32.totalorder %s39, 2
      %s41 = scalar_select %p40, 0, %s39
      %s42 = ssub.s32 %s29, %s41
      %s43 = ssub.s32 %s30, %s37
      %s44 = sor.u32 %s42, %s43
      %p45 = scmp.eq.s32.totalorder %s44, 0
      %s47 = sadd.s32 %s46, 1
      %s48 = scalar_select %p45, %s46, %s47
      %p51 = pneg %p45
      %p52 = scmp.eq.s32.totalorder %s22, 7
      %p53 = por %p51, %p52
      %p54 = scmp.ne.s32.totalorder %s46, %s49
      %p55 = scmp.eq.s32.totalorder %s22, 0
      %p56 = por %p54, %p55
      %p57 = scmp.ne.s32.totalorder %s46, %s49
      %p58 = scmp.eq.s32.totalorder %s27, 7
      %p59 = por %p57, %p58
      %p60 = scmp.ne.s32.totalorder %s49, %s50
      %p61 = scmp.eq.s32.totalorder %s27, 0
      %p62 = por %p60, %p61
      %p63 = scmp.ne.s32.totalorder %s49, %s50
      %p64 = scmp.eq.s32.totalorder %s28, 7
      %p65 = por %p63, %p64
      %p67 = scmp.ne.s32.totalorder %s50, %s66
      %p68 = scmp.eq.s32.totalorder %s28, 0
      %p69 = por %p67, %p68
      %s70 = ssub.s32 %s29, %s41
      %s71 = ssub.s32 %s30, %s37
      %s72 = sor.u32 %s70, %s71
      %p73 = scmp.eq.s32.totalorder %s72, 0
      %s75 = sadd.s32 %s74, 1
      %s76 = scalar_select %p73, %s74, %s75
      %p79 = pneg %p73
      %p80 = scmp.eq.s32.totalorder %s22, 7
      %p81 = por %p79, %p80
      %p82 = scmp.ne.s32.totalorder %s74, %s77
      %p83 = scmp.eq.s32.totalorder %s22, 0
      %p84 = por %p82, %p83
      %p85 = scmp.ne.s32.totalorder %s74, %s77
      %p86 = scmp.eq.s32.totalorder %s27, 7
      %p87 = por %p85, %p86
      %p88 = scmp.ne.s32.totalorder %s77, %s78
      %p89 = scmp.eq.s32.totalorder %s27, 0
      %p90 = por %p88, %p89
      %p91 = scmp.ne.s32.totalorder %s77, %s78
      %p92 = scmp.eq.s32.totalorder %s28, 7
      %p93 = por %p91, %p92
      %p95 = scmp.ne.s32.totalorder %s78, %s94
      %p96 = scmp.eq.s32.totalorder %s28, 0
      %p97 = por %p95, %p96
      %s98 = ssub.s32 %s29, %s41
      %p99 = scmp.eq.s32.totalorder %s98, 0
      %s101 = sadd.s32 %s100, 1
      %s102 = scalar_select %p99, %s100, %s101
      %p105 = pneg %p99
      %p106 = scmp.eq.s32.totalorder %s22, 7
      %p107 = por %p105, %p106
      %p108 = scmp.ne.s32.totalorder %s100, %s103
      %p109 = scmp.eq.s32.totalorder %s22, 0
      %p110 = por %p108, %p109
      %p111 = scmp.ne.s32.totalorder %s100, %s103
      %p112 = scmp.eq.s32.totalorder %s27, 7
      %p113 = por %p111, %p112
      %p114 = scmp.ne.s32.totalorder %s103, %s104
      %p115 = scmp.eq.s32.totalorder %s27, 0
      %p116 = por %p114, %p115
      %p117 = scmp.ne.s32.totalorder %s103, %s104
      %p118 = scmp.eq.s32.totalorder %s28, 7
      %p119 = por %p117, %p118
      %p121 = scmp.ne.s32.totalorder %s104, %s120
      %p122 = scmp.eq.s32.totalorder %s28, 0
      %p123 = por %p121, %p122
      %s124 = ssub.s32 %s29, %s41
      %p125 = scmp.eq.s32.totalorder %s124, 0
      %s127 = sadd.s32 %s126, 1
      %s128 = scalar_select %p125, %s126, %s127
      %p131 = pneg %p125
      %p132 = scmp.eq.s32.totalorder %s22, 7
      %p133 = por %p131, %p132
      %p134 = scmp.ne.s32.totalorder %s126, %s129
      %p135 = scmp.eq.s32.totalorder %s22, 0
      %p136 = por %p134, %p135
      %p137 = scmp.ne.s32.totalorder %s126, %s129
      %p138 = scmp.eq.s32.totalorder %s27, 7
      %p139 = por %p137, %p138
      %p140 = scmp.ne.s32.totalorder %s129, %s130
      %p141 = scmp.eq.s32.totalorder %s27, 0
      %p142 = por %p140, %p141
      %p143 = scmp.ne.s32.totalorder %s129, %s130
      %p144 = scmp.eq.s32.totalorder %s28, 7
      %p145 = por %p143, %p144
      %p147 = scmp.ne.s32.totalorder %s130, %s146
      %p148 = scmp.eq.s32.totalorder %s28, 0
      %p149 = por %p147, %p148
      %p150 = scmp.le.s32.totalorder 1, %s22
      %p151 = scmp.lt.s32.totalorder %s22, 9
      %p152 = pnand %p150, %p151
      %p153 = pneg %p152
      // Predicated region
      $region9: #{tpu_custom_call.1} parent=5 // pred_check
        _
      $region10: #{tpu_custom_call.1} parent=5 // pred_check_branch
        %155 = sbr.rel (%p152) target = $region12
      $region11: #{tpu_custom_call.1} parent=5 // pred_region
        %s156 = ssub.s32 %s22, 1
      $region12: #{tpu_custom_call.1} parent=5 // pred_fallthru
        _
      %p157 = scmp.lt.s32.totalorder %s22, 8
      // Predicated region
      $region13: #{tpu_custom_call.1} parent=5 // pred_check
        %p158 = pneg %p157
      $region14: #{tpu_custom_call.1} parent=5 // pred_check_branch
        %160 = sbr.rel (%p158) target = $region16
      $region15: #{tpu_custom_call.1} parent=5 // pred_region
        // Predicated region
        $region17: #{tpu_custom_call.1} parent=15 // pred_check
          %p161 = pneg %p56
        $region18: #{tpu_custom_call.1} parent=15 // pred_check_branch
          %163 = sbr.rel (%p161) target = $region20
        $region19: #{tpu_custom_call.1} parent=15 // pred_region
          %s164 = sand.u32 %s46, 1
          %s165 = scalar_lea.sflag [#allocation12], %s164
          %s166 = sand.u32 %s46, 1
          %s167 = smul.addr %s166, 24
          %s168 = scalar_lea.vmem [#allocation11], %s167
          %s170 = ssub.s32 384, 384
          %171 = vsyncadd %s165, %s170
          %s172 = smul.addr %s29, 12
          %s173 = sadd.s32 %s30, %s172
          %s174 = smul.addr %s173, 128
          %s175 = scalar_lea.hbm %s0, %s174
          %s176 = sshll.u32 %s168, 4
          %s177 = int_to_ptr.vmem [resolvable:$true] %s176
          %182 = dma.hbm_to_vmem [thread:$0]  %s175, 384, %s177, %s165, 512, 128, 8
        $region20: #{tpu_custom_call.1} parent=15 // pred_fallthru
          _
        // Predicated region
        $region21: #{tpu_custom_call.1} parent=15 // pred_check
          %p183 = pneg %p84
        $region22: #{tpu_custom_call.1} parent=15 // pred_check_branch
          %185 = sbr.rel (%p183) target = $region24
        $region23: #{tpu_custom_call.1} parent=15 // pred_region
          %s186 = sand.u32 %s74, 1
          %s187 = scalar_lea.sflag [#allocation15], %s186
          %s188 = sand.u32 %s74, 1
          %s189 = smul.addr %s188, 24
          %s190 = scalar_lea.vmem [#allocation14], %s189
          %s192 = ssub.s32 384, 384
          %193 = vsyncadd %s187, %s192
          %s194 = smul.addr %s29, 12
          %s195 = sadd.s32 %s30, %s194
          %s196 = smul.addr %s195, 128
          %s197 = scalar_lea.hbm %s1, %s196
          %s198 = sshll.u32 %s190, 4
          %s199 = int_to_ptr.vmem [resolvable:$true] %s198
          %204 = dma.hbm_to_vmem [thread:$0]  %s197, 384, %s199, %s187, 512, 128, 8
        $region24: #{tpu_custom_call.1} parent=15 // pred_fallthru
          _
      $region16: #{tpu_custom_call.1} parent=5 // pred_fallthru
        _
      %p205 = scmp.le.s32.totalorder 1, %s22
      %p206 = scmp.lt.s32.totalorder %s22, 9
      %p207 = pnand %p205, %p206
      %p208 = pneg %p207
      // Predicated region
      $region25: #{tpu_custom_call.1} parent=5 // pred_check
        _
      $region26: #{tpu_custom_call.1} parent=5 // pred_check_branch
        %210 = sbr.rel (%p207) target = $region28
      $region27: #{tpu_custom_call.1} parent=5 // pred_region
        %s211 = ssub.s32 %s22, 1
        %s212 = sand.u32 %s49, 1
        %s213 = scalar_lea.sflag [#allocation12], %s212
        %s214 = sand.u32 %s49, 1
        %s215 = smul.addr %s214, 24
        %s216 = scalar_lea.vmem [#allocation11], %s215
        // Predicated region
        $region29: #{tpu_custom_call.1} parent=27 // pred_check
          %p217 = pneg %p62
        $region30: #{tpu_custom_call.1} parent=27 // pred_check_branch
          %219 = sbr.rel (%p217) target = $region32
        $region31: #{tpu_custom_call.1} parent=27 // pred_region
          %220 = dma.done %s213, 384
        $region32: #{tpu_custom_call.1} parent=27 // pred_fallthru
          _
        %s221 = sand.u32 %s77, 1
        %s222 = scalar_lea.sflag [#allocation15], %s221
        %s223 = sand.u32 %s77, 1
        %s224 = smul.addr %s223, 24
        %s225 = scalar_lea.vmem [#allocation14], %s224
        // Predicated region
        $region33: #{tpu_custom_call.1} parent=27 // pred_check
          %p226 = pneg %p90
        $region34: #{tpu_custom_call.1} parent=27 // pred_check_branch
          %228 = sbr.rel (%p226) target = $region36
        $region35: #{tpu_custom_call.1} parent=27 // pred_region
          %229 = dma.done %s222, 384
        $region36: #{tpu_custom_call.1} parent=27 // pred_fallthru
          _
        %s230 = sand.u32 %s49, 1
        %s231 = scalar_lea.sflag [#allocation12], %s230
        %s232 = sand.u32 %s49, 1
        %s233 = smul.addr %s232, 24
        %s234 = scalar_lea.vmem [#allocation11], %s233
        %p235 = pneg %p62
        %p236 = pneg %p59
        %s237 = sand.u32 %s77, 1
        %s238 = scalar_lea.sflag [#allocation15], %s237
        %s239 = sand.u32 %s77, 1
        %s240 = smul.addr %s239, 24
        %s241 = scalar_lea.vmem [#allocation14], %s240
        %p242 = pneg %p90
        %p243 = pneg %p87
        %p244 = pneg %p116
        %p245 = pneg %p113
        %s246 = sand.u32 %s103, 1
        %s247 = scalar_lea.sflag [#allocation13], %s246
        %s248 = sand.u32 %s103, 1
        %s249 = smul.addr %s248, 8
        %s250 = scalar_lea.vmem [#allocation16], %s249
        %p251 = pneg %p142
        %p252 = pneg %p139
        %s253 = sand.u32 %s129, 1
        %s254 = scalar_lea.sflag [#allocation18], %s253
        %s255 = sand.u32 %s129, 1
        %s256 = scalar_lea.vmem [#allocation17], %s255
        %p257 = scmp.eq.s32.totalorder %s32, 0
        // Predicated region
        $region37: #{tpu_custom_call.1} parent=27 // pred_check
          %p258 = pneg %p257
        $region38: #{tpu_custom_call.1} parent=27 // pred_check_branch
          %260 = sbr.rel (%p258) target = $region40
        $region39: #{tpu_custom_call.1} parent=27 // pred_region
          %261 = vst [vmem:[#allocation2] sm:$0x1] 0.0
          %262 = vst [vmem:[#allocation3] sm:$0x1] 0.0
          %vm263 = vcmask 1032192
          %264 = vst.msk [vmem:[#allocation4] sm:$0x1] %vm263, 0.0
          %265 = vst.msk [vmem:[#allocation5] sm:$0x1] %vm263, 0.0
          %266 = vst [vmem:[#allocation6] sm:$0x1] 0.0
          %267 = vst [vmem:[#allocation7] sm:$0x1] 0.0
          %268 = vst [vmem:[#allocation8] sm:$0x7] 0.0
        $region40: #{tpu_custom_call.1} parent=27 // pred_fallthru
          _
        %v269 = vld [vmem:[%s216] sm:$0xff]
        %v270 = vld [vmem:[%s216 + $0x8] sm:$0xff]
        %v271 = vld [vmem:[%s216 + $0x10] sm:$0xff]
        %v272 = vld [vmem:[%s225] sm:$0xff]
        %v273 = vld [vmem:[%s225 + $0x8] sm:$0xff]
        %v274 = vld [vmem:[%s225 + $0x10] sm:$0xff]
        %v275 = vsub.f32 %v269, %v272
        %v276 = vsub.f32 %v270, %v273
        %v277 = vsub.f32 %v271, %v274
        %v278 = vmul.f32 %v275, %v275
        %v279 = vmul.f32 %v276, %v276
        %v280 = vmul.f32 %v277, %v277
        %v281 = vadd.f32 %v278, 0.0
        %v282 = vadd.f32 %v281, %v279
        %v283 = vadd.f32 %v282, %v280
        %v284 = vld [vmem:[#allocation2] sm:$0x1]
        %v285 = vadd.f32 %v283, 0.0
        %v286 = vrot.slane %v285, 4
        %v287 = vadd.f32 %v285, %v286
        %v288 = vrot.slane %v287, 2
        %v289 = vadd.f32 %v287, %v288
        %v290 = vrot.slane %v289, 1
        %v291 = vadd.f32 %v289, %v290
        %v292 = vadd.f32 %v284, %v291
        %293 = vst [vmem:[#allocation2] sm:$0x1] %v292
        %v294 = vmul.f32 %v269, 0.299
        %v295 = vmul.f32 %v270, 0.587
        %v296 = vadd.f32 %v294, %v295
        %v297 = vmul.f32 %v271, 0.114
        %v298 = vadd.f32 %v296, %v297
        %v299 = vmul.f32 %v272, 0.299
        %v300 = vmul.f32 %v273, 0.587
        %v301 = vadd.f32 %v299, %v300
        %v302 = vmul.f32 %v274, 0.114
        %v303 = vadd.f32 %v301, %v302
        %v304 = vsub.f32 %v298, %v303
        %p305 = scmp.gt.s32.totalorder %s32, 0
        // Predicated region
        $region41: #{tpu_custom_call.1} parent=27 // pred_check
          %p306 = pneg %p305
        $region42: #{tpu_custom_call.1} parent=27 // pred_check_branch
          %308 = sbr.rel (%p306) target = $region44
        $region43: #{tpu_custom_call.1} parent=27 // pred_region
          %v309 = vld [vmem:[#allocation9] sm:$0x1]
          %v310 = vsub.f32 %v309, %v298
          %v311 = vld [vmem:[#allocation10] sm:$0x1]
          %v312 = vsub.f32 %v311, %v304
          %v313 = vld [vmem:[#allocation6] sm:$0x1]
          %v314 = vand.u32 2147483647, %v310
          %v315 = vadd.f32 %v314, 0.0
          %v316 = vadd.f32 %v313, %v315
          %317 = vst [vmem:[#allocation6] sm:$0x1] %v316
          %v318 = vld [vmem:[#allocation7] sm:$0x1]
          %v319 = vmul.f32 %v312, %v312
          %v320 = vadd.f32 %v319, 0.0
          %v321 = vadd.f32 %v318, %v320
          %322 = vst [vmem:[#allocation7] sm:$0x1] %v321
        $region44: #{tpu_custom_call.1} parent=27 // pred_fallthru
          _
        %v323 = vld [vmem:[#allocation3] sm:$0x1]
        %v324 = vsub.f32 %v298, 0.6
        %v325 = vmul.f32 %v324, %v324
        %v326 = vadd.f32 %v325, 0.0
        %v327 = vrot.slane %v326, 4
        %v328 = vadd.f32 %v326, %v327
        %v329 = vrot.slane %v328, 2
        %v330 = vadd.f32 %v328, %v329
        %v331 = vrot.slane %v330, 1
        %v332 = vadd.f32 %v330, %v331
        %v333 = vadd.f32 %v323, %v332
        %334 = vst [vmem:[#allocation3] sm:$0x1] %v333
        %336 = vrot.lane.b32.xlu0 %v298, 127
        %v337 = vpop.permute.xlu0 %336
        %v339 = vsub.f32 %v298, %v337
        %341 = vrot.lane.b32.xlu0 %v304, 127
        %v342 = vpop.permute.xlu0 %341
        %v344 = vsub.f32 %v304, %v342
        %v345 = vld [vmem:[#allocation4] sm:$0x1]
        %v346 = vand.u32 2147483647, %v339
        %v347 = vadd.f32 %v346, 0.0
        %vm348 = vcmask 1039360
        %v349 = vsel %vm348, %v347, 0.0
        %v350 = vrot.slane %v349, 4
        %v351 = vadd.f32 %v349, %v350
        %v352 = vrot.slane %v351, 2
        %v353 = vadd.f32 %v351, %v352
        %v354 = vrot.slane %v353, 1
        %v355 = vadd.f32 %v353, %v354
        %v356 = vadd.f32 %v345, %v355
        %vm357 = vcmask 1032192
        %358 = vst.msk [vmem:[#allocation4] sm:$0x1] %vm357, %v356
        %v359 = vld [vmem:[#allocation5] sm:$0x1]
        %v360 = vmul.f32 %v344, %v344
        %v361 = vadd.f32 %v360, 0.0
        %v362 = vsel %vm348, %v361, 0.0
        %v363 = vrot.slane %v362, 4
        %v364 = vadd.f32 %v362, %v363
        %v365 = vrot.slane %v364, 2
        %v366 = vadd.f32 %v364, %v365
        %v367 = vrot.slane %v366, 1
        %v368 = vadd.f32 %v366, %v367
        %v369 = vadd.f32 %v359, %v368
        %370 = vst.msk [vmem:[#allocation5] sm:$0x1] %vm357, %v369
        %v371 = vrot.slane %v298, 1
        %v373 = vsub.f32 %v298, %v371
        %v374 = vrot.slane %v304, 1
        %v376 = vsub.f32 %v304, %v374
        %v377 = vld [vmem:[#allocation6] sm:$0x1]
        %v378 = vand.u32 2147483647, %v373
        %v379 = vadd.f32 %v378, 0.0
        %vm380 = vcmask 1046528
        %v381 = vsel %vm380, %v379, 0.0
        %v382 = vrot.slane %v381, 4
        %v383 = vadd.f32 %v381, %v382
        %v384 = vrot.slane %v383, 2
        %v385 = vadd.f32 %v383, %v384
        %v386 = vrot.slane %v385, 1
        %v387 = vadd.f32 %v385, %v386
        %v388 = vadd.f32 %v377, %v387
        %389 = vst [vmem:[#allocation6] sm:$0x1] %v388
        %v390 = vld [vmem:[#allocation7] sm:$0x1]
        %v391 = vmul.f32 %v376, %v376
        %v392 = vadd.f32 %v391, 0.0
        %v393 = vsel %vm380, %v392, 0.0
        %v394 = vrot.slane %v393, 4
        %v395 = vadd.f32 %v393, %v394
        %v396 = vrot.slane %v395, 2
        %v397 = vadd.f32 %v395, %v396
        %v398 = vrot.slane %v397, 1
        %v399 = vadd.f32 %v397, %v398
        %v400 = vadd.f32 %v390, %v399
        %401 = vst [vmem:[#allocation7] sm:$0x1] %v400
        %v402 = vld [vmem:[#allocation8] sm:$0x7]
        %v403 = vrot.slane %v269, 4
        %v404 = vadd.f32 %v269, %v403
        %v405 = vrot.slane %v404, 2
        %v406 = vadd.f32 %v404, %v405
        %v407 = vrot.slane %v406, 1
        %v408 = vadd.f32 %v406, %v407
        %v409 = vrot.slane %v270, 4
        %v410 = vadd.f32 %v270, %v409
        %v411 = vrot.slane %v410, 2
        %v412 = vadd.f32 %v410, %v411
        %v413 = vrot.slane %v412, 1
        %v414 = vadd.f32 %v412, %v413
        %v415 = vrot.slane %v271, 4
        %v416 = vadd.f32 %v271, %v415
        %v417 = vrot.slane %v416, 2
        %v418 = vadd.f32 %v416, %v417
        %v419 = vrot.slane %v418, 1
        %v420 = vadd.f32 %v418, %v419
        %vm424 = vcmask 1041409
        %v425 = vsel %vm424, %v414, %v408
        %vm426 = vcmask 1042434
        %v427 = vsel %vm426, %v420, %v425
        %v429 = vadd.f32 %v402, %v427
        %430 = vst [vmem:[#allocation8] sm:$0x7] %v429
        %431 = vst [vmem:[#allocation9 - $0x7] sm:$0x80] %v298
        %432 = vst [vmem:[#allocation10 - $0x7] sm:$0x80] %v304
        %p433 = scmp.eq.s32.totalorder %s32, 3
        // Predicated region
        $region45: #{tpu_custom_call.1} parent=27 // pred_check
          %p434 = pneg %p433
        $region46: #{tpu_custom_call.1} parent=27 // pred_check_branch
          %436 = sbr.rel (%p434) target = $region48
        $region47: #{tpu_custom_call.1} parent=27 // pred_region
          %v437 = vld [vmem:[#allocation2] sm:$0x1]
          %vm438 = vcmask 1040384
          %v439 = vsel %vm438, %v437, 0.0
          %440 = vadd.xlane.f32.xlu0 %v439
          %v441 = vpop.xlane.xlu0 %440
          %v442 = vrot.slane %v441, 4
          %v443 = vadd.f32 %v441, %v442
          %v444 = vrot.slane %v443, 2
          %v445 = vadd.f32 %v443, %v444
          %v446 = vrot.slane %v445, 1
          %v447 = vadd.f32 %v445, %v446
          %s448 = vtos %v447
          %v449 = vstv %s448
          %v450 = vld [vmem:[#allocation4] sm:$0x1]
          %v451 = vsel %vm357, %v450, 0.0
          %452 = vadd.xlane.f32.xlu0 %v451
          %v453 = vpop.xlane.xlu0 %452
          %v454 = vrot.slane %v453, 4
          %v455 = vadd.f32 %v453, %v454
          %v456 = vrot.slane %v455, 2
          %v457 = vadd.f32 %v455, %v456
          %v458 = vrot.slane %v457, 1
          %v459 = vadd.f32 %v457, %v458
          %s460 = vtos %v459
          %v461 = vstv %s460
          %v462 = vld [vmem:[#allocation6] sm:$0x1]
          %v463 = vsel %vm438, %v462, 0.0
          %464 = vadd.xlane.f32.xlu0 %v463
          %v465 = vpop.xlane.xlu0 %464
          %v466 = vrot.slane %v465, 4
          %v467 = vadd.f32 %v465, %v466
          %v468 = vrot.slane %v467, 2
          %v469 = vadd.f32 %v467, %v468
          %v470 = vrot.slane %v469, 1
          %v471 = vadd.f32 %v469, %v470
          %s472 = vtos %v471
          %v473 = vstv %s472
          %v474 = vld [vmem:[#allocation5] sm:$0x1]
          %v475 = vsel %vm357, %v474, 0.0
          %476 = vadd.xlane.f32.xlu0 %v475
          %v477 = vpop.xlane.xlu0 %476
          %v478 = vrot.slane %v477, 4
          %v479 = vadd.f32 %v477, %v478
          %v480 = vrot.slane %v479, 2
          %v481 = vadd.f32 %v479, %v480
          %v482 = vrot.slane %v481, 1
          %v483 = vadd.f32 %v481, %v482
          %s484 = vtos %v483
          %v485 = vstv %s484
          %v486 = vld [vmem:[#allocation7] sm:$0x1]
          %v487 = vsel %vm438, %v486, 0.0
          %488 = vadd.xlane.f32.xlu0 %v487
          %v489 = vpop.xlane.xlu0 %488
          %v490 = vrot.slane %v489, 4
          %v491 = vadd.f32 %v489, %v490
          %v492 = vrot.slane %v491, 2
          %v493 = vadd.f32 %v491, %v492
          %v494 = vrot.slane %v493, 1
          %v495 = vadd.f32 %v493, %v494
          %s496 = vtos %v495
          %v497 = vstv %s496
          %v498 = vld [vmem:[#allocation3] sm:$0x1]
          %v499 = vsel %vm438, %v498, 0.0
          %500 = vadd.xlane.f32.xlu0 %v499
          %v501 = vpop.xlane.xlu0 %500
          %v502 = vrot.slane %v501, 4
          %v503 = vadd.f32 %v501, %v502
          %v504 = vrot.slane %v503, 2
          %v505 = vadd.f32 %v503, %v504
          %v506 = vrot.slane %v505, 1
          %v507 = vadd.f32 %v505, %v506
          %s508 = vtos %v507
          %v509 = vstv %s508
          %v510 = vsel %vm438, %v449, %v461
          %vm511 = vcmask 1041408
          %v512 = vsel %vm511, %v510, %v473
          %vm513 = vcmask 1042432
          %v514 = vsel %vm513, %v512, %v485
          %vm515 = vcmask 1043456
          %v516 = vsel %vm515, %v514, %v497
          %vm517 = vcmask 1044480
          %v518 = vsel %vm517, %v516, %v509
          %vm519 = vcmask 1045504
          %v520 = vsel %vm519, %v518, 0.0
          %v521 = vsel %vm380, %v520, 0.0
          %522 = vst [vmem:[%s250] sm:$0xff] %v521
          %v523 = vld [vmem:[#allocation8] sm:$0x7]
          %v524 = vsel %vm438, %v523, 0.0
          %525 = vadd.xlane.f32.xlu0 %v524
          %v526 = vpop.xlane.xlu0 %525
          %v527 = vmul.f32 %v526, 0.00024414063
          %v528 = vsel %vm424, %v523, 0.0
          %529 = vadd.xlane.f32.xlu0 %v528
          %v530 = vpop.xlane.xlu0 %529
          %v531 = vmul.f32 %v530, 0.00024414063
          %v532 = vsel %vm426, %v523, 0.0
          %533 = vadd.xlane.f32.xlu0 %v532
          %v534 = vpop.xlane.xlu0 %533
          %v535 = vmul.f32 %v534, 0.00024414063
          %v537 = vrot.slane %v531, 1
          %v539 = vsub.f32 %v527, %v537
          %v540 = vmul.f32 %v539, %v539
          %v542 = vrot.slane %v535, 2
          %v544 = vsub.f32 %v527, %v542
          %v545 = vmul.f32 %v544, %v544
          %v546 = vrot.slane %v531, 7
          %v548 = vsub.f32 %v535, %v546
          %v549 = vmul.f32 %v548, %v548
          %v550 = vmul.f32 %v540, %v540
          %v551 = vmul.f32 %v545, %v545
          %v552 = vadd.f32 %v550, %v551
          %v553 = vmul.f32 %v549, %v549
          %v555 = vrot.slane %v553, 2
          %v557 = vadd.f32 %v552, %v555
          %v558 = vrsqrt.pop %v557
          %v559 = vmul.f32 %v557, %v558
          %vm560 = vcmp.eq.f32.partialorder %v557, inf
          %v561 = vsel %vm560, %v557, %v559
          %vm562 = vcmp.eq.f32.partialorder %v557, 0.0
          %v563 = vand.u32 %v557, 2147483648
          %v564 = vsel %vm562, %v563, %v561
          %566 = vset.pattern.permute.xlu0 0
          %567 = vperm.xlu0 %566, %v564
          %v568 = vpop.permute.xlu0 %567
          %570 = vst [vmem:[%s256] sm:$0x1] %v568
        $region48: #{tpu_custom_call.1} parent=27 // pred_fallthru
          _
        %s571 = sand.u32 %s103, 1
        %s572 = scalar_lea.sflag [#allocation13], %s571
        %s573 = sand.u32 %s103, 1
        %s574 = smul.addr %s573, 8
        %s575 = scalar_lea.vmem [#allocation16], %s574
        %s576 = sand.u32 %s129, 1
        %s577 = scalar_lea.sflag [#allocation18], %s576
        %s578 = sand.u32 %s129, 1
        %s579 = scalar_lea.vmem [#allocation17], %s578
        // Predicated region
        $region49: #{tpu_custom_call.1} parent=27 // pred_check
          %p580 = pneg %p113
        $region50: #{tpu_custom_call.1} parent=27 // pred_check_branch
          %582 = sbr.rel (%p580) target = $region52
        $region51: #{tpu_custom_call.1} parent=27 // pred_region
          %s584 = ssub.s32 128, 128
          %585 = vsyncadd %s572, %s584
          %s586 = smul.addr %s31, 128
          %s587 = scalar_lea.hbm %s2, %s586
          %s589 = sshll.u32 %s575, 4
          %s590 = int_to_ptr.vmem [resolvable:$true] %s589
          %592 = dma.vmem_to_hbm [thread:$0]  %s590, 128, %s587, %s572
        $region52: #{tpu_custom_call.1} parent=27 // pred_fallthru
          _
        // Predicated region
        $region53: #{tpu_custom_call.1} parent=27 // pred_check
          %p593 = pneg %p139
        $region54: #{tpu_custom_call.1} parent=27 // pred_check_branch
          %595 = sbr.rel (%p593) target = $region56
        $region55: #{tpu_custom_call.1} parent=27 // pred_region
          %s597 = ssub.s32 16, 16
          %598 = vsyncadd %s577, %s597
          %s599 = smul.addr %s31, 16
          %s600 = scalar_lea.hbm %s3, %s599
          %s602 = sshll.u32 %s579, 4
          %s603 = int_to_ptr.vmem [resolvable:$true] %s602
          %605 = dma.vmem_to_hbm [thread:$0]  %s603, 16, %s600, %s577
        $region56: #{tpu_custom_call.1} parent=27 // pred_fallthru
          _
      $region28: #{tpu_custom_call.1} parent=5 // pred_fallthru
        _
      %p606 = scmp.le.s32.totalorder 2, %s22
      // Predicated region
      $region57: #{tpu_custom_call.1} parent=5 // pred_check
        %p607 = pneg %p606
      $region58: #{tpu_custom_call.1} parent=5 // pred_check_branch
        %609 = sbr.rel (%p607) target = $region60
      $region59: #{tpu_custom_call.1} parent=5 // pred_region
        %s610 = ssub.s32 %s22, 2
        // Predicated region
        $region61: #{tpu_custom_call.1} parent=59 // pred_check
          %p611 = pneg %p119
        $region62: #{tpu_custom_call.1} parent=59 // pred_check_branch
          %613 = sbr.rel (%p611) target = $region64
        $region63: #{tpu_custom_call.1} parent=59 // pred_region
          %s614 = sand.u32 %s104, 1
          %s615 = scalar_lea.sflag [#allocation13], %s614
          %s616 = sand.u32 %s104, 1
          %s617 = smul.addr %s616, 8
          %s618 = scalar_lea.vmem [#allocation16], %s617
          %619 = dma.done %s615, 128
        $region64: #{tpu_custom_call.1} parent=59 // pred_fallthru
          _
        // Predicated region
        $region65: #{tpu_custom_call.1} parent=59 // pred_check
          %p620 = pneg %p145
        $region66: #{tpu_custom_call.1} parent=59 // pred_check_branch
          %622 = sbr.rel (%p620) target = $region68
        $region67: #{tpu_custom_call.1} parent=59 // pred_region
          %s623 = sand.u32 %s130, 1
          %s624 = scalar_lea.sflag [#allocation18], %s623
          %s625 = sand.u32 %s130, 1
          %s626 = scalar_lea.vmem [#allocation17], %s625
          %627 = dma.done %s624, 16
        $region68: #{tpu_custom_call.1} parent=59 // pred_fallthru
          _
      $region60: #{tpu_custom_call.1} parent=5 // pred_fallthru
        _
    $region6: #{tpu_custom_call.1} parent=1 // loop_footer
      %s26 = sadd.s32 1, %s22
    $region7: #{tpu_custom_call.1} parent=1 // loop_footer_branch
      %21 = sbr.rel target = $region3
    $region8: #{tpu_custom_call.1} parent=1 // loop_exit
      _
    %628 = vsyncpa [#allocation12], 1
    %s629 = scalar_lea.sflag [#allocation12], 1
    %630 = vsyncpa %s629, 1
    %631 = vsyncpa [#allocation15], 1
    %s632 = scalar_lea.sflag [#allocation15], 1
    %633 = vsyncpa %s632, 1
    %634 = vsyncpa [#allocation13], 1
    %s635 = scalar_lea.sflag [#allocation13], 1
    %636 = vsyncpa %s635, 1
    %637 = vsyncpa [#allocation18], 1
    %s638 = scalar_lea.sflag [#allocation18], 1
    %639 = vsyncpa %s638, 1

</llo_original>
